<compile_context>
chip_gen: v7x
topology: tpu7x:2x2x1
jax: 0.10.0
libtpu: 0.0.40
codegen_flags: <defaults>
</compile_context>

<pallas_src>
import jax
import jax.numpy as jnp
from jax.experimental import pallas as pl
from jax.experimental.pallas import tpu as pltpu


def _round_up(x, m):
    return ((x + m - 1) // m) * m


def _gated_u_kernel(f_ref, w_ref, b_ref, o_ref):
    # f_ref: (TM, D) tile of features (VMEM)
    # w_ref: (1, D)  full W_U in nn.Linear layout (VMEM, constant block index
    #                across the grid -> fetched once, kept resident)
    # b_ref: (1, 1)  bias scalar (SMEM)
    # o_ref: (TM, 1) sigmoid(f @ W^T + b)
    #
    # Output is 1-wide, so skip the MXU entirely: VPU elementwise multiply
    # (with a sublane broadcast of w) + XLU cross-lane reduction, f32 accum.
    prod = f_ref[...] * w_ref[...]                       # (TM, D)  VPU
    logits = jnp.sum(prod, axis=-1, keepdims=True)       # (TM, 1)  XLU reduce
    o_ref[...] = jax.nn.sigmoid(logits + b_ref[0, 0]).astype(o_ref.dtype)


def gated_attention_layer_u(features, W_U, b_U, *, tm=None):
    """sigmoid(F.linear(features, W_U, b_U)) via a Pallas TPU kernel.

    features: (N, D) float32
    W_U:      (1, D) float32   (out_features=1, in_features=D)
    b_U:      (1,)   float32
    returns:  (N, 1) float32
    """
    N, D = features.shape
    assert W_U.shape == (1, D)
    assert b_U.shape == (1,)

    if tm is None:
        # Target ~2 MiB of feature rows per grid step (mem-bound kernel: big
        # tiles amortize the ~0.35us per-step overhead), rounded to a multiple
        # of 8 sublanes and capped at 2048 rows so a double-buffered tile is
        # comfortably inside scoped VMEM on every generation (incl. v7x).
        target_bytes = 2 * 1024 * 1024
        tm = (target_bytes // (D * 4)) // 8 * 8
        tm = max(8, min(2048, tm))
    # Never use a tile larger than the (8-row padded) problem itself.
    tm = min(tm, _round_up(N, 8))

    n_pad = _round_up(N, tm)
    f = features.astype(jnp.float32)
    if n_pad != N:
        # Zero-pad the tail tile; padded rows are sliced off below.
        f = jnp.pad(f, ((0, n_pad - N), (0, 0)))

    b2d = b_U.reshape(1, 1).astype(jnp.float32)

    grid = (n_pad // tm,)
    out = pl.pallas_call(
        _gated_u_kernel,
        out_shape=jax.ShapeDtypeStruct((n_pad, 1), jnp.float32),
        grid_spec=pltpu.PrefetchScalarGridSpec(
            num_scalar_prefetch=0,
            grid=grid,
            in_specs=[
                pl.BlockSpec((tm, D), lambda i: (i, 0)),            # features
                pl.BlockSpec((1, D), lambda i: (0, 0)),             # weight
                pl.BlockSpec(memory_space=pltpu.MemorySpace.SMEM),  # bias
            ],
            out_specs=pl.BlockSpec((tm, 1), lambda i: (i, 0)),
        ),
        compiler_params=pltpu.CompilerParams(
            dimension_semantics=("parallel",)
        ),
    )(f, W_U.astype(jnp.float32), b2d)

    return out[:N] if n_pad != N else out


if __name__ == "__main__":
    key = jax.random.PRNGKey(0)
    k_feat, k_w, k_b = jax.random.split(key, 3)

    # Small shapes consistent with the module (Linear(dim, 1) gate per row).
    # N=20 is deliberately not a multiple of 8 to exercise the pad+slice path.
    N, D = 20, 32
    features = jax.random.normal(k_feat, (N, D), dtype=jnp.float32)
    W_U = jax.random.normal(k_w, (1, D), dtype=jnp.float32) * 0.1
    b_U = jax.random.normal(k_b, (1,), dtype=jnp.float32) * 0.1

    out = gated_attention_layer_u(features, W_U, b_U)
    out = jax.block_until_ready(out)

    # Pure-JAX reference for correctness check.
    ref = jax.nn.sigmoid(features @ W_U.T + b_U[None, :])
    assert out.shape == (N, 1)
    assert jnp.allclose(out, ref, atol=1e-5, rtol=1e-5), "mismatch vs reference"

    print("KERNEL_OK")
</pallas_src>

<mosaic_0001>
module attributes {stable_mosaic.version = 11 : i64} {
  func.func @_gated_u_kernel(%arg0: i32, %arg1: memref<24x32xf32, #tpu.memory_space<vmem>>, %arg2: memref<1x32xf32, #tpu.memory_space<vmem>>, %arg3: memref<1x1xf32, #tpu.memory_space<smem>>, %arg4: memref<24x1xf32, #tpu.memory_space<vmem>>) attributes {dimension_semantics = [#tpu.dimension_semantics<parallel>], iteration_bounds = array<i64: 1>, scalar_prefetch = 0 : i64, scratch_operands = 0 : i64, tpu.core_type = #tpu.core_type<tc>, window_params = [{transform_indices = @transform_0, window_bounds = array<i64: 24, 32>}, {pipeline_mode = #tpu.pipeline_mode<synchronous>, transform_indices = @transform_1, window_bounds = array<i64: 1, 32>}, {transform_indices = @transform_2, window_bounds = array<i64: 1, 1>}, {transform_indices = @transform_3, window_bounds = array<i64: 24, 1>}]} {
    %c0 = arith.constant 0 : index
    %c0_0 = arith.constant 0 : index
    %0 = vector.load %arg1[%c0, %c0_0] : memref<24x32xf32, #tpu.memory_space<vmem>>, vector<24x32xf32>
    %c0_1 = arith.constant 0 : index
    %c0_2 = arith.constant 0 : index
    %1 = vector.load %arg2[%c0_1, %c0_2] : memref<1x32xf32, #tpu.memory_space<vmem>>, vector<1x32xf32>
    %2 = vector.broadcast %1 : vector<1x32xf32> to vector<24x32xf32>
    %3 = arith.mulf %0, %2 : vector<24x32xf32>
    %cst = arith.constant dense<0.000000e+00> : vector<24xf32>
    %4 = vector.multi_reduction <add>, %3, %cst [1] : vector<24x32xf32> to vector<24xf32>
    %5 = vector.shape_cast %4 : vector<24xf32> to vector<24x1xf32>
    %c0_3 = arith.constant 0 : index
    %c0_4 = arith.constant 0 : index
    %6 = memref.load %arg3[%c0_3, %c0_4] : memref<1x1xf32, #tpu.memory_space<smem>>
    %7 = vector.broadcast %6 : f32 to vector<24x1xf32>
    %8 = arith.addf %5, %7 : vector<24x1xf32>
    %9 = arith.negf %8 : vector<24x1xf32>
    %10 = math.exp %9 : vector<24x1xf32>
    %cst_5 = arith.constant 1.000000e+00 : f32
    %11 = vector.broadcast %cst_5 : f32 to vector<24x1xf32>
    %12 = arith.addf %11, %10 : vector<24x1xf32>
    %13 = arith.divf %11, %12 : vector<24x1xf32>
    %c0_6 = arith.constant 0 : index
    %c0_7 = arith.constant 0 : index
    %14 = vector.load %arg4[%c0_6, %c0_7] : memref<24x1xf32, #tpu.memory_space<vmem>>, vector<24x1xf32>
    tpu.vector_store %arg4[%c0_6, %c0_7], %13 {strides = array<i32>} : memref<24x1xf32, #tpu.memory_space<vmem>>, vector<24x1xf32>,
    return
  }
  func.func @transform_0(%arg0: i32) -> (i32, i32) {
    %c0_i32 = arith.constant 0 : i32
    %c0_i32_0 = arith.constant 0 : i32
    return %arg0, %c0_i32 : i32, i32
  }
  func.func @transform_1(%arg0: i32) -> (i32, i32) {
    %c0_i32 = arith.constant 0 : i32
    %c0_i32_0 = arith.constant 0 : i32
    %c0_i32_1 = arith.constant 0 : i32
    return %c0_i32, %c0_i32_0 : i32, i32
  }
  func.func @transform_2(%arg0: i32) -> (i32, i32) {
    %c0_i32 = arith.constant 0 : i32
    %c0_i32_0 = arith.constant 0 : i32
    %c0_i32_1 = arith.constant 0 : i32
    return %c0_i32, %c0_i32_0 : i32, i32
  }
  func.func @transform_3(%arg0: i32) -> (i32, i32) {
    %c0_i32 = arith.constant 0 : i32
    %c0_i32_0 = arith.constant 0 : i32
    return %arg0, %c0_i32 : i32, i32
  }
}

</mosaic_0001>

<llo_original>
// kernel: tpu_custom_call.1
$region0: #{tpu_custom_call.1}
  #allocation0 [shape = 'u32[]', space=smem, size = 0x4, offset = 0x4, fixed_abs, tag = 'smem constant byte address 0x4 - core index']
  #allocation1 [shape = 'u32[144,128]{1,0:T(1,128)}', space=vmem, size = 0x12000, scoped, tag = 'internal scratch']
  #allocation2 [shape = 'f32[1,1]{1,0:T(1,128)S(6)}', space=smem, size = 0x200, scoped, tag = 'scoped memory for tpu_custom_call.1']
  %s0 = inlined_call_operand.hbm [shape: f32[24,32], index: 0, kind: input, shape index: {}]
  %s1 = inlined_call_operand.vmem [shape: f32[1,32], index: 1, kind: input, shape index: {}]
  %s2 = inlined_call_operand.<no memory space> [shape: f32[1,1], index: 2, kind: input, shape index: {}]
  %s3 = inlined_call_operand.vmem [shape: f32[24,1], index: 3, kind: output, shape index: {}]
  %s4 = sld [smem:[#allocation0]]
  $region26: #{tpu_custom_call.1} parent=0
    _
  %s6 = ssub.s32 1, %s4
  %s7 = scalar_select 0, %s6, %s4
  %8 = sst [smem:[#allocation2]] %s2
  $region1: #{tpu_custom_call.1} parent=0
    #allocation3 [shape = 'u8[12288]{0}', space=vmem, size = 0x3000, scoped, tag = 'input window, operand 0, single buffered']
    #allocation4 [shape = 's32[1]{0}', space=sflag, size = 0x4, scoped, tag = 'scoped memory for tpu_custom_call.1']
    %9 = vsyncpa [#allocation4], 0
    // Predicated region
    $region2: #{tpu_custom_call.1} parent=1 // pred_check
      _
    $region3: #{tpu_custom_call.1} parent=1 // pred_check_branch
      %11 = sbr.rel (0) target = $region5
    $region4: #{tpu_custom_call.1} parent=1 // pred_region
      %s13 = ssub.s32 384, 384
      %14 = vsyncadd [#allocation4], %s13
      %s15 = sshll.u32 [#allocation3], 4
      %s16 = int_to_ptr.vmem [resolvable:$true] %s15
      %21 = dma.hbm_to_vmem [thread:$0]  %s0, 384, %s16, [#allocation4], 128, 128, 8
    $region5: #{tpu_custom_call.1} parent=1 // pred_fallthru
      _
    // Predicated region
    $region6: #{tpu_custom_call.1} parent=1 // pred_check
      _
    $region7: #{tpu_custom_call.1} parent=1 // pred_check_branch
      %23 = sbr.rel (0) target = $region9
    $region8: #{tpu_custom_call.1} parent=1 // pred_region
      _
    $region9: #{tpu_custom_call.1} parent=1 // pred_fallthru
      _
    // Predicated region
    $region10: #{tpu_custom_call.1} parent=1 // pred_check
      _
    $region11: #{tpu_custom_call.1} parent=1 // pred_check_branch
      %25 = sbr.rel (0) target = $region13
    $region12: #{tpu_custom_call.1} parent=1 // pred_region
      _
    $region13: #{tpu_custom_call.1} parent=1 // pred_fallthru
      _
    // Predicated region
    $region14: #{tpu_custom_call.1} parent=1 // pred_check
      _
    $region15: #{tpu_custom_call.1} parent=1 // pred_check_branch
      %27 = sbr.rel (0) target = $region17
    $region16: #{tpu_custom_call.1} parent=1 // pred_region
      %28 = dma.done [#allocation4], 384
    $region17: #{tpu_custom_call.1} parent=1 // pred_fallthru
      _
    %v29 = vld [vmem:[#allocation3] sm:$0xff]
    %v30 = vld [vmem:[#allocation3 + $0x8] sm:$0xff]
    %v31 = vld [vmem:[#allocation3 + $0x10] sm:$0xff]
    %v32 = vld [vmem:[%s1] sm:$0x1]
    %v34 = vlaneseq
    %v35 = vshrl.u32 %v34, 7
    %v36 = vsub.s32 0, %v35
    %v37 = vrot.slane %v32, %v36
    %v39 = vmul.f32 %v29, %v37
    %v40 = vmul.f32 %v30, %v37
    %v41 = vmul.f32 %v31, %v37
    %vm42 = vcmask 261120
    %v43 = vsel %vm42, %v39, 0.0
    %44 = vadd.xlane.f32.xlu0 %v43
    %v45 = vpop.xlane.xlu0 %44
    %v46 = vsel %vm42, %v40, 0.0
    %47 = vadd.xlane.f32.xlu0 %v46
    %v48 = vpop.xlane.xlu0 %47
    %v49 = vsel %vm42, %v41, 0.0
    %50 = vadd.xlane.f32.xlu0 %v49
    %v51 = vpop.xlane.xlu0 %50
    %s52 = sld [smem:[#allocation2]]
    %v53 = vstv %s52
    %v54 = vadd.f32 %v45, %v53
    %v55 = vadd.f32 %v48, %v53
    %v56 = vadd.f32 %v51, %v53
    %v57 = vxor.u32 %v54, 2147483648
    %v58 = vxor.u32 %v55, 2147483648
    %v59 = vxor.u32 %v56, 2147483648
    %v60 = vmul.f32 %v57, 1.442695
    %v61 = vpow.pop %v60
    %v62 = vmul.f32 %v58, 1.442695
    %v63 = vpow.pop %v62
    %v64 = vmul.f32 %v59, 1.442695
    %v65 = vpow.pop %v64
    %v66 = vadd.f32 %v61, 1.0
    %v67 = vadd.f32 %v63, 1.0
    %v68 = vadd.f32 %v65, 1.0
    %v69 = vrcp.pop %v66
    %v70 = vmul.f32 1.0, %v69
    %v71 = vrcp.pop %v67
    %v72 = vmul.f32 1.0, %v71
    %v73 = vrcp.pop %v68
    %v74 = vmul.f32 1.0, %v73
    %vm75 = vcmask 7168
    %76 = vst.msk [vmem:[%s3] sm:$0xff] %vm75, %v70
    %77 = vst.msk [vmem:[%s3 + $0x8] sm:$0xff] %vm75, %v72
    %78 = vst.msk [vmem:[%s3 + $0x10] sm:$0xff] %vm75, %v74
    // Predicated region
    $region18: #{tpu_custom_call.1} parent=1 // pred_check
      _
    $region19: #{tpu_custom_call.1} parent=1 // pred_check_branch
      %80 = sbr.rel (0) target = $region21
    $region20: #{tpu_custom_call.1} parent=1 // pred_region
      _
    $region21: #{tpu_custom_call.1} parent=1 // pred_fallthru
      _
    // Predicated region
    $region22: #{tpu_custom_call.1} parent=1 // pred_check
      _
    $region23: #{tpu_custom_call.1} parent=1 // pred_check_branch
      %82 = sbr.rel (0) target = $region25
    $region24: #{tpu_custom_call.1} parent=1 // pred_region
      _
    $region25: #{tpu_custom_call.1} parent=1 // pred_fallthru
      _
    %83 = vsyncpa [#allocation4], 1

</llo_original>
